<compile_context>
chip_gen: v6e
topology: v6e:2x2x1
jax: 0.10.0
libtpu: 0.0.40
codegen_flags: <defaults>
</compile_context>

<pallas_src>
import functools
import math

import jax
import jax.numpy as jnp
from jax.experimental import pallas as pl
from jax.experimental.pallas import tpu as pltpu

_MIB = 1024 * 1024


def _tpu_vmem_bytes_and_cores():
    """(per-TensorCore VMEM bytes, TensorCores per chip), with safe fallbacks."""
    vmem = 64 * _MIB          # conservative default (v7x per-TC VMEM)
    cores = 0
    try:
        info = pltpu.get_tpu_info()
        vmem = int(getattr(info, "vmem_capacity_bytes", vmem) or vmem)
        cores = int(getattr(info, "num_cores", 0) or 0)
    except Exception:         # query unavailable: stay conservative (1 TC, 64 MiB)
        return vmem, 1
    if cores <= 0:
        # Of the targeted chips (v5e/v6e/v7x), only v7x (64 MiB per-TC VMEM) has 2 TCs.
        cores = 2 if vmem <= 96 * _MIB else 1
    return vmem, cores


def _fused_proj_ce_kernel(x_ref, w_ref, y_ref, loss_ref,
                          m_sc, d_sc, xy_sc, *,
                          ignore_index, tv, ts, n_inner, x_resident):
    """One (parallel seq-chunk, vocab-tile, seq-tile) grid step.

    Grid axis 0: seq super-chunk ('parallel'; megacore sharding on 2-TC chips).
    Grid axis 1: vocab tiles     ('arbitrary'; softmax reduction, W tile changes here).
    Grid axis 2: seq tiles       ('arbitrary'; W tile stays resident across it).

    Scratch persists across the grid, indexed by the global seq-tile id g:
      m_sc / d_sc / xy_sc: running max / sum-of-exp / logit-at-label, (S//ts, ts, 1) f32.
    """
    p = pl.program_id(0)
    j = pl.program_id(1)
    i = pl.program_id(2)
    g = p * n_inner + i                      # global seq-tile id

    @pl.when(j == 0)
    def _():
        m_sc[g] = jnp.full(m_sc.shape[1:], -jnp.inf, dtype=m_sc.dtype)
        d_sc[g] = jnp.zeros(d_sc.shape[1:], dtype=d_sc.dtype)
        xy_sc[g] = jnp.zeros(xy_sc.shape[1:], dtype=xy_sc.dtype)

    if x_resident:
        # x kept fully VMEM-resident; slice the current seq tile out of it.
        x_tile = x_ref[pl.ds(pl.multiple_of(g * ts, ts), ts), :]
    else:
        x_tile = x_ref[...]

    # (ts, tv) f32 logits from bf16 operands; contracting dims (1, 1) so the MXU
    # consumes the weight tile in its stored [tv, H] layout (no relayout / .T).
    logits = jax.lax.dot_general(
        x_tile, w_ref[...],
        dimension_numbers=(((1,), (1,)), ((), ())),
        preferred_element_type=jnp.float32)

    y = y_ref[...]                           # (ts, 1) int32
    # Logit at the label column: exactly one vocab tile hits each row's label.
    # Offset the small (ts, 1) labels by -j*tv instead of adding j*tv across the
    # full (ts, tv) iota (saves a full-tile VALU pass per step).  ignore_index and
    # out-of-range labels never match and leave xy at 0.
    rel = y - j * tv
    hit = jax.lax.broadcasted_iota(jnp.int32, logits.shape, 1) == rel
    xy_sc[g] = xy_sc[g] + jnp.sum(jnp.where(hit, logits, 0.0), axis=1, keepdims=True)

    # Online-softmax recurrence (same as the Triton kernel).
    block_max = jnp.max(logits, axis=1, keepdims=True)
    m_prev = m_sc[g]
    m_new = jnp.maximum(m_prev, block_max)
    d_new = d_sc[g] * jnp.exp(m_prev - m_new) + \
        jnp.sum(jnp.exp(logits - m_new), axis=1, keepdims=True)
    m_sc[g] = m_new
    d_sc[g] = d_new

    # Store the per-row loss only on the LAST vocab tile.  The output block is
    # revisited across the vocab axis; the final (correct) writeback happens after
    # this last visit, so intermediate visits need no store.
    @pl.when(j == pl.num_programs(1) - 1)
    def _():
        loss = -(xy_sc[g] - m_new - jnp.log(d_new))
        valid = y != ignore_index
        # Ignored rows contribute 0 (the Triton kernel leaves them unwritten; they
        # are excluded from the mean either way).
        loss_ref[...] = jnp.where(valid, loss, 0.0)


def fused_proj_ce(x, y, w_proj, *, ignore_index=-100, ts=None, tv=None,
                  compute_dtype=jnp.bfloat16, w_buffers=2):
    """Forward of FusedProjCE: mean CE of (x @ w_proj.T) over non-ignored tokens.

    compute_dtype is part of the API contract (logits computed on the MXU in this
    dtype with f32 accumulation).  Pass w_proj already in compute_dtype to avoid a
    full-weight cast pass before the kernel.
    Returns NaN if every label equals ignore_index (matches torch cross_entropy).
    """
    S, H = x.shape
    V, H2 = w_proj.shape
    assert H == H2
    wsize = jnp.dtype(compute_dtype).itemsize

    vmem_cap, cores = _tpu_vmem_bytes_and_cores()
    budget = min(int(vmem_cap * 7 // 8), 112 * _MIB)   # ~56 MiB on v7x, 112 on v5e/v6e

    if ts is None:
        ts = next(c for c in (512, 256, 128, 64, 32, 16, 8, S) if c <= S and S % c == 0)
    assert S % ts == 0, f"seq_len={S} must be divisible by ts={ts}"

    # Keep x fully VMEM-resident when cheap: removes the V//tv-fold x re-streaming.
    x_resident = (2 * S * H * wsize) <= budget // 4

    def footprint(tv_):
        w_b = w_buffers * tv_ * H * wsize                  # weight tiles (multi-buffered)
        x_b = 2 * (S if x_resident else ts) * H * wsize    # x tiles (double-buffered)
        tmp_b = 4 * ts * tv_ * 4                           # f32 logits + elementwise temps
        sc_b = 3 * S * 4                                   # m / d / xy scratch
        io_b = 4 * ts * 4                                  # label + loss blocks
        return w_b + x_b + tmp_b + sc_b + io_b + 2 * _MIB  # + slack

    if tv is None:
        cands = ([V] if V <= 4096 else []) + [c for c in (2048, 1024, 512, 256, 128)
                                              if c < V and V % c == 0]
        tv = next((c for c in cands if footprint(c) <= budget),
                  cands[-1] if cands else V)
    assert V % tv == 0, f"vocab={V} must be divisible by tv={tv}"

    vmem_limit = int(min(max(int(footprint(tv) * 1.25), 32 * _MIB), budget))

    n_seq_tiles = S // ts
    n_par = cores if (cores > 1 and n_seq_tiles % cores == 0) else 1
    n_inner = n_seq_tiles // n_par

    # Only cast when needed.  NOTE: a full f32->bf16 cast of w here costs ~6 B/elt of
    # HBM traffic (3x the kernel's 2 B/elt weight streaming); store bf16 weights.
    x_c = x if x.dtype == compute_dtype else x.astype(compute_dtype)
    w_c = w_proj if w_proj.dtype == compute_dtype else w_proj.astype(compute_dtype)
    y2 = y.reshape(S, 1).astype(jnp.int32)

    seq_idx = lambda p, j, i: (p * n_inner + i, 0)
    x_idx = (lambda p, j, i: (0, 0)) if x_resident else seq_idx
    x_block = (S, H) if x_resident else (ts, H)

    w_spec_kwargs = {}
    if w_buffers > 2:   # opt-in deeper W prefetch for 128 MiB VMEM chips (v5e/v6e)
        w_spec_kwargs["pipeline_mode"] = pl.Buffered(w_buffers)

    grid = (n_par, V // tv, n_inner)

    per_row_loss = pl.pallas_call(
        functools.partial(_fused_proj_ce_kernel, ignore_index=ignore_index,
                          tv=tv, ts=ts, n_inner=n_inner, x_resident=x_resident),
        out_shape=jax.ShapeDtypeStruct((S, 1), jnp.float32),
        grid_spec=pltpu.PrefetchScalarGridSpec(
            num_scalar_prefetch=0,
            grid=grid,
            in_specs=[
                pl.BlockSpec(x_block, x_idx),                                # x
                pl.BlockSpec((tv, H), lambda p, j, i: (j, 0), **w_spec_kwargs),  # w tile
                pl.BlockSpec((ts, 1), seq_idx),                              # labels
            ],
            out_specs=pl.BlockSpec((ts, 1), seq_idx),
            scratch_shapes=[
                pltpu.VMEM((n_seq_tiles, ts, 1), jnp.float32),   # running max m
                pltpu.VMEM((n_seq_tiles, ts, 1), jnp.float32),   # running denom d
                pltpu.VMEM((n_seq_tiles, ts, 1), jnp.float32),   # logit at label
            ],
        ),
        compiler_params=pltpu.CompilerParams(
            # Leading seq super-chunk axis is parallel (megacore on v7x); the vocab
            # reduction and inner seq axes are arbitrary (shared accumulator scratch).
            dimension_semantics=("parallel", "arbitrary", "arbitrary"),
            vmem_limit_bytes=vmem_limit),
    )(x_c, w_c, y2)

    # NaN when every label == ignore_index, matching torch.nn.functional.cross_entropy.
    n_valid = jnp.sum(y != ignore_index).astype(jnp.float32)
    return jnp.sum(per_row_loss) / n_valid


def _reference_loss(x, y, w_proj, ignore_index=-100, compute_dtype=jnp.bfloat16):
    logits = jax.lax.dot_general(
        x.astype(compute_dtype), w_proj.astype(compute_dtype),
        dimension_numbers=(((1,), (1,)), ((), ())),
        preferred_element_type=jnp.float32)
    m = jnp.max(logits, axis=-1, keepdims=True)
    lse = m[:, 0] + jnp.log(jnp.sum(jnp.exp(logits - m), axis=-1))
    xy = jnp.take_along_axis(logits, jnp.clip(y, 0, None)[:, None], axis=-1)[:, 0]
    per_row = jnp.where(y != ignore_index, lse - xy, 0.0)
    return jnp.sum(per_row) / jnp.sum(y != ignore_index)


if __name__ == "__main__":
    ignore_index = -100
    k1, k2, k3, k4, k5, k6 = jax.random.split(jax.random.PRNGKey(0), 6)

    # Case 1: tiny shapes implied by the module (x [seq, hidden], y [seq], w [vocab, hidden]).
    seq_len, hidden, vocab = 8, 32, 256
    x = jax.random.normal(k1, (seq_len, hidden), dtype=jnp.float32)
    y = jax.random.randint(k2, (seq_len,), 0, vocab, dtype=jnp.int32)
    y = y.at[1].set(ignore_index)                      # exercise the ignore_index path
    bound = math.sqrt(2.0 / hidden)                    # kaiming_uniform_(a=sqrt(2)) bound
    w_proj = jax.random.uniform(k3, (vocab, hidden), dtype=jnp.float32,
                                minval=-bound, maxval=bound)

    loss = jax.block_until_ready(fused_proj_ce(x, y, w_proj, ignore_index=ignore_index))
    ref = _reference_loss(x, y, w_proj, ignore_index)
    assert jnp.allclose(loss, ref, rtol=1e-3, atol=2e-3), (loss, ref)

    # Case 2: force multiple seq and vocab tiles (exercises the online-softmax
    # accumulation across the reduction axis and the gated last-tile store).
    seq_len2, hidden2, vocab2 = 16, 32, 256
    x2 = jax.random.normal(k4, (seq_len2, hidden2), dtype=jnp.float32)
    y2 = jax.random.randint(k5, (seq_len2,), 0, vocab2, dtype=jnp.int32)
    y2 = y2.at[3].set(ignore_index)
    bound2 = math.sqrt(2.0 / hidden2)
    w2 = jax.random.uniform(k6, (vocab2, hidden2), dtype=jnp.float32,
                            minval=-bound2, maxval=bound2)
    loss2 = jax.block_until_ready(
        fused_proj_ce(x2, y2, w2, ignore_index=ignore_index, ts=8, tv=128))
    ref2 = _reference_loss(x2, y2, w2, ignore_index)
    assert jnp.allclose(loss2, ref2, rtol=1e-3, atol=2e-3), (loss2, ref2)

    print("KERNEL_OK")
</pallas_src>

<mosaic_0001>
module attributes {stable_mosaic.version = 11 : i64} {
  func.func @_fused_proj_ce_kernel(%arg0: i32, %arg1: i32, %arg2: i32, %arg3: memref<8x32xbf16, #tpu.memory_space<vmem>>, %arg4: memref<256x32xbf16, #tpu.memory_space<vmem>>, %arg5: memref<8x1xi32, #tpu.memory_space<vmem>>, %arg6: memref<8x1xf32, #tpu.memory_space<vmem>>, %arg7: memref<1x8x1xf32, #tpu.memory_space<vmem>>, %arg8: memref<1x8x1xf32, #tpu.memory_space<vmem>>, %arg9: memref<1x8x1xf32, #tpu.memory_space<vmem>>) attributes {dimension_semantics = [#tpu.dimension_semantics<parallel>, #tpu.dimension_semantics<arbitrary>, #tpu.dimension_semantics<arbitrary>], iteration_bounds = array<i64: 1, 1, 1>, scalar_prefetch = 0 : i64, scratch_operands = 3 : i64, tpu.core_type = #tpu.core_type<tc>, window_params = [{pipeline_mode = #tpu.pipeline_mode<synchronous>, transform_indices = @transform_0, window_bounds = array<i64: 8, 32>}, {transform_indices = @transform_1, window_bounds = array<i64: 256, 32>}, {transform_indices = @transform_2, window_bounds = array<i64: 8, 1>}, {transform_indices = @transform_3, window_bounds = array<i64: 8, 1>}]} {
    %c1_i32 = arith.constant 1 : i32
    %0 = arith.muli %arg0, %c1_i32 : i32
    %1 = arith.addi %0, %arg2 : i32
    %c0_i32 = arith.constant 0 : i32
    %2 = arith.cmpi eq, %arg1, %c0_i32 : i32
    %3 = arith.extui %2 : i1 to i32
    %c0_i32_0 = arith.constant 0 : i32
    %4 = arith.cmpi ne, %3, %c0_i32_0 : i32
    scf.if %4 {
      %cst_23 = arith.constant 0xFF800000 : f32
      %59 = vector.broadcast %cst_23 : f32 to vector<8x1xf32>
      %60 = arith.index_cast %1 : i32 to index
      %c0_24 = arith.constant 0 : index
      %c0_25 = arith.constant 0 : index
      %61 = vector.load %arg7[%60, %c0_24, %c0_25] : memref<1x8x1xf32, #tpu.memory_space<vmem>>, vector<1x8x1xf32>
      %62 = vector.shape_cast %61 : vector<1x8x1xf32> to vector<8x1xf32>
      %63 = vector.shape_cast %59 : vector<8x1xf32> to vector<1x8x1xf32>
      tpu.vector_store %arg7[%60, %c0_24, %c0_25], %63 {strides = array<i32>} : memref<1x8x1xf32, #tpu.memory_space<vmem>>, vector<1x8x1xf32>,
      %cst_26 = arith.constant 0.000000e+00 : f32
      %64 = vector.broadcast %cst_26 : f32 to vector<8x1xf32>
      %65 = arith.index_cast %1 : i32 to index
      %c0_27 = arith.constant 0 : index
      %c0_28 = arith.constant 0 : index
      %66 = vector.load %arg8[%65, %c0_27, %c0_28] : memref<1x8x1xf32, #tpu.memory_space<vmem>>, vector<1x8x1xf32>
      %67 = vector.shape_cast %66 : vector<1x8x1xf32> to vector<8x1xf32>
      %68 = vector.shape_cast %64 : vector<8x1xf32> to vector<1x8x1xf32>
      tpu.vector_store %arg8[%65, %c0_27, %c0_28], %68 {strides = array<i32>} : memref<1x8x1xf32, #tpu.memory_space<vmem>>, vector<1x8x1xf32>,
      %cst_29 = arith.constant 0.000000e+00 : f32
      %69 = vector.broadcast %cst_29 : f32 to vector<8x1xf32>
      %70 = arith.index_cast %1 : i32 to index
      %c0_30 = arith.constant 0 : index
      %c0_31 = arith.constant 0 : index
      %71 = vector.load %arg9[%70, %c0_30, %c0_31] : memref<1x8x1xf32, #tpu.memory_space<vmem>>, vector<1x8x1xf32>
      %72 = vector.shape_cast %71 : vector<1x8x1xf32> to vector<8x1xf32>
      %73 = vector.shape_cast %69 : vector<8x1xf32> to vector<1x8x1xf32>
      tpu.vector_store %arg9[%70, %c0_30, %c0_31], %73 {strides = array<i32>} : memref<1x8x1xf32, #tpu.memory_space<vmem>>, vector<1x8x1xf32>,
    } else {
    }
    %c8_i32 = arith.constant 8 : i32
    %5 = arith.muli %1, %c8_i32 : i32
    %6 = tpu.assume_multiple %5, 8 : i32
    %7 = arith.index_cast %6 : i32 to index
    %c0 = arith.constant 0 : index
    %8 = vector.load %arg3[%7, %c0] : memref<8x32xbf16, #tpu.memory_space<vmem>>, vector<8x32xbf16>
    %c0_1 = arith.constant 0 : index
    %c0_2 = arith.constant 0 : index
    %9 = vector.load %arg4[%c0_1, %c0_2] : memref<256x32xbf16, #tpu.memory_space<vmem>>, vector<256x32xbf16>
    %cst = arith.constant dense<0.000000e+00> : vector<8x256xf32>
    %10 = tpu.matmul %8, %9, %cst {dimension_numbers = #tpu.dot_dimension_numbers<[1], [1], [0], [0], [0, 0, 1, 0], [], []>} : vector<8x32xbf16>, vector<256x32xbf16>, vector<8x256xf32> -> vector<8x256xf32>
    %c0_3 = arith.constant 0 : index
    %c0_4 = arith.constant 0 : index
    %11 = vector.load %arg5[%c0_3, %c0_4] : memref<8x1xi32, #tpu.memory_space<vmem>>, vector<8x1xi32>
    %c256_i32 = arith.constant 256 : i32
    %12 = arith.muli %arg1, %c256_i32 : i32
    %13 = vector.broadcast %12 : i32 to vector<8x1xi32>
    %14 = arith.subi %11, %13 : vector<8x1xi32>
    %15 = tpu.iota {dimensions = array<i32: 1>} : vector<8x256xi32>
    %16 = vector.broadcast %14 : vector<8x1xi32> to vector<8x256xi32>
    %17 = arith.cmpi eq, %15, %16 : vector<8x256xi32>
    %18 = arith.index_cast %1 : i32 to index
    %c0_5 = arith.constant 0 : index
    %c0_6 = arith.constant 0 : index
    %19 = vector.load %arg9[%18, %c0_5, %c0_6] : memref<1x8x1xf32, #tpu.memory_space<vmem>>, vector<1x8x1xf32>
    %20 = vector.shape_cast %19 : vector<1x8x1xf32> to vector<8x1xf32>
    %cst_7 = arith.constant 0.000000e+00 : f32
    %21 = vector.broadcast %cst_7 : f32 to vector<8x256xf32>
    %22 = arith.select %17, %10, %21 : vector<8x256xi1>, vector<8x256xf32>
    %cst_8 = arith.constant dense<0.000000e+00> : vector<8xf32>
    %23 = vector.multi_reduction <add>, %22, %cst_8 [1] : vector<8x256xf32> to vector<8xf32>
    %24 = vector.shape_cast %23 : vector<8xf32> to vector<8x1xf32>
    %25 = arith.addf %20, %24 : vector<8x1xf32>
    %26 = arith.index_cast %1 : i32 to index
    %c0_9 = arith.constant 0 : index
    %c0_10 = arith.constant 0 : index
    %27 = vector.load %arg9[%26, %c0_9, %c0_10] : memref<1x8x1xf32, #tpu.memory_space<vmem>>, vector<1x8x1xf32>
    %28 = vector.shape_cast %27 : vector<1x8x1xf32> to vector<8x1xf32>
    %29 = vector.shape_cast %25 : vector<8x1xf32> to vector<1x8x1xf32>
    tpu.vector_store %arg9[%26, %c0_9, %c0_10], %29 {strides = array<i32>} : memref<1x8x1xf32, #tpu.memory_space<vmem>>, vector<1x8x1xf32>,
    %cst_11 = arith.constant dense<0xFF800000> : vector<8xf32>
    %30 = vector.multi_reduction <maximumf>, %10, %cst_11 [1] : vector<8x256xf32> to vector<8xf32>
    %31 = vector.shape_cast %30 : vector<8xf32> to vector<8x1xf32>
    %32 = arith.index_cast %1 : i32 to index
    %c0_12 = arith.constant 0 : index
    %c0_13 = arith.constant 0 : index
    %33 = vector.load %arg7[%32, %c0_12, %c0_13] : memref<1x8x1xf32, #tpu.memory_space<vmem>>, vector<1x8x1xf32>
    %34 = vector.shape_cast %33 : vector<1x8x1xf32> to vector<8x1xf32>
    %35 = arith.maximumf %34, %31 : vector<8x1xf32>
    %36 = arith.index_cast %1 : i32 to index
    %c0_14 = arith.constant 0 : index
    %c0_15 = arith.constant 0 : index
    %37 = vector.load %arg8[%36, %c0_14, %c0_15] : memref<1x8x1xf32, #tpu.memory_space<vmem>>, vector<1x8x1xf32>
    %38 = vector.shape_cast %37 : vector<1x8x1xf32> to vector<8x1xf32>
    %39 = arith.subf %34, %35 : vector<8x1xf32>
    %40 = math.exp %39 : vector<8x1xf32>
    %41 = arith.mulf %38, %40 : vector<8x1xf32>
    %42 = vector.broadcast %35 : vector<8x1xf32> to vector<8x256xf32>
    %43 = arith.subf %10, %42 : vector<8x256xf32>
    %44 = math.exp %43 : vector<8x256xf32>
    %cst_16 = arith.constant dense<0.000000e+00> : vector<8xf32>
    %45 = vector.multi_reduction <add>, %44, %cst_16 [1] : vector<8x256xf32> to vector<8xf32>
    %46 = vector.shape_cast %45 : vector<8xf32> to vector<8x1xf32>
    %47 = arith.addf %41, %46 : vector<8x1xf32>
    %48 = arith.index_cast %1 : i32 to index
    %c0_17 = arith.constant 0 : index
    %c0_18 = arith.constant 0 : index
    %49 = vector.load %arg7[%48, %c0_17, %c0_18] : memref<1x8x1xf32, #tpu.memory_space<vmem>>, vector<1x8x1xf32>
    %50 = vector.shape_cast %49 : vector<1x8x1xf32> to vector<8x1xf32>
    %51 = vector.shape_cast %35 : vector<8x1xf32> to vector<1x8x1xf32>
    tpu.vector_store %arg7[%48, %c0_17, %c0_18], %51 {strides = array<i32>} : memref<1x8x1xf32, #tpu.memory_space<vmem>>, vector<1x8x1xf32>,
    %52 = arith.index_cast %1 : i32 to index
    %c0_19 = arith.constant 0 : index
    %c0_20 = arith.constant 0 : index
    %53 = vector.load %arg8[%52, %c0_19, %c0_20] : memref<1x8x1xf32, #tpu.memory_space<vmem>>, vector<1x8x1xf32>
    %54 = vector.shape_cast %53 : vector<1x8x1xf32> to vector<8x1xf32>
    %55 = vector.shape_cast %47 : vector<8x1xf32> to vector<1x8x1xf32>
    tpu.vector_store %arg8[%52, %c0_19, %c0_20], %55 {strides = array<i32>} : memref<1x8x1xf32, #tpu.memory_space<vmem>>, vector<1x8x1xf32>,
    %c0_i32_21 = arith.constant 0 : i32
    %56 = arith.cmpi eq, %arg1, %c0_i32_21 : i32
    %57 = arith.extui %56 : i1 to i32
    %c0_i32_22 = arith.constant 0 : i32
    %58 = arith.cmpi ne, %57, %c0_i32_22 : i32
    scf.if %58 {
      %59 = arith.index_cast %1 : i32 to index
      %c0_23 = arith.constant 0 : index
      %c0_24 = arith.constant 0 : index
      %60 = vector.load %arg9[%59, %c0_23, %c0_24] : memref<1x8x1xf32, #tpu.memory_space<vmem>>, vector<1x8x1xf32>
      %61 = vector.shape_cast %60 : vector<1x8x1xf32> to vector<8x1xf32>
      %62 = arith.subf %61, %35 : vector<8x1xf32>
      %63 = math.log %47 : vector<8x1xf32>
      %64 = arith.subf %62, %63 : vector<8x1xf32>
      %cst_25 = arith.constant 0.000000e+00 : f32
      %65 = vector.broadcast %cst_25 : f32 to vector<8x1xf32>
      %66 = arith.subf %65, %64 : vector<8x1xf32>
      %c-100_i32 = arith.constant -100 : i32
      %67 = vector.broadcast %c-100_i32 : i32 to vector<8x1xi32>
      %68 = arith.cmpi ne, %11, %67 : vector<8x1xi32>
      %cst_26 = arith.constant 0.000000e+00 : f32
      %69 = vector.broadcast %cst_26 : f32 to vector<8x1xf32>
      %70 = arith.select %68, %66, %69 : vector<8x1xi1>, vector<8x1xf32>
      %c0_27 = arith.constant 0 : index
      %c0_28 = arith.constant 0 : index
      %71 = vector.load %arg6[%c0_27, %c0_28] : memref<8x1xf32, #tpu.memory_space<vmem>>, vector<8x1xf32>
      tpu.vector_store %arg6[%c0_27, %c0_28], %70 {strides = array<i32>} : memref<8x1xf32, #tpu.memory_space<vmem>>, vector<8x1xf32>,
    } else {
    }
    return
  }
  func.func @transform_0(%arg0: i32, %arg1: i32, %arg2: i32) -> (i32, i32) {
    %c0_i32 = arith.constant 0 : i32
    %c0_i32_0 = arith.constant 0 : i32
    %c0_i32_1 = arith.constant 0 : i32
    return %c0_i32, %c0_i32_0 : i32, i32
  }
  func.func @transform_1(%arg0: i32, %arg1: i32, %arg2: i32) -> (i32, i32) {
    %c0_i32 = arith.constant 0 : i32
    %c0_i32_0 = arith.constant 0 : i32
    return %arg1, %c0_i32 : i32, i32
  }
  func.func @transform_2(%arg0: i32, %arg1: i32, %arg2: i32) -> (i32, i32) {
    %c1_i32 = arith.constant 1 : i32
    %0 = arith.muli %arg0, %c1_i32 : i32
    %1 = arith.addi %0, %arg2 : i32
    %c0_i32 = arith.constant 0 : i32
    %c0_i32_0 = arith.constant 0 : i32
    return %1, %c0_i32 : i32, i32
  }
  func.func @transform_3(%arg0: i32, %arg1: i32, %arg2: i32) -> (i32, i32) {
    %c1_i32 = arith.constant 1 : i32
    %0 = arith.muli %arg0, %c1_i32 : i32
    %1 = arith.addi %0, %arg2 : i32
    %c0_i32 = arith.constant 0 : i32
    %c0_i32_0 = arith.constant 0 : i32
    return %1, %c0_i32 : i32, i32
  }
}

</mosaic_0001>

<llo_original>
// kernel: tpu_custom_call.1
$region0: #{tpu_custom_call.1}
  #allocation0 [shape = 'u32[]', space=smem, size = 0x4, offset = 0x4, fixed_abs, tag = 'smem constant byte address 0x4 - core index']
  #allocation1 [shape = 'u32[144,128]{1,0:T(1,128)}', space=vmem, size = 0x12000, scoped, tag = 'internal scratch']
  #allocation2 [shape = 'f32[1,8,1]{2,1,0:T(8,128)}', space=vmem, size = 0x1000, scoped, tag = 'scratch operand']
  #allocation3 [shape = 'f32[1,8,1]{2,1,0:T(8,128)}', space=vmem, size = 0x1000, scoped, tag = 'scratch operand']
  #allocation4 [shape = 'f32[1,8,1]{2,1,0:T(8,128)}', space=vmem, size = 0x1000, scoped, tag = 'scratch operand']
  %s0 = inlined_call_operand.vmem [shape: bf16[8,32], index: 0, kind: input, shape index: {}]
  %s1 = inlined_call_operand.vmem [shape: bf16[256,32], index: 1, kind: input, shape index: {}]
  %s2 = inlined_call_operand.vmem [shape: s32[8,1], index: 2, kind: input, shape index: {}]
  %s3 = inlined_call_operand.vmem [shape: f32[8,1], index: 3, kind: output, shape index: {}]
  %s4 = sld [smem:[#allocation0]]
  $region30: #{tpu_custom_call.1} parent=0
    _
  %s6 = ssub.s32 1, %s4
  %s7 = scalar_select 0, %s6, %s4
  // Predicated region
  $region2: #{tpu_custom_call.1} parent=0 // pred_check
    _
  $region3: #{tpu_custom_call.1} parent=0 // pred_check_branch
    %9 = sbr.rel (0) target = $region5
  $region4: #{tpu_custom_call.1} parent=0 // pred_region
    _
  $region5: #{tpu_custom_call.1} parent=0 // pred_fallthru
    _
  // Predicated region
  $region6: #{tpu_custom_call.1} parent=0 // pred_check
    _
  $region7: #{tpu_custom_call.1} parent=0 // pred_check_branch
    %11 = sbr.rel (0) target = $region9
  $region8: #{tpu_custom_call.1} parent=0 // pred_region
    _
  $region9: #{tpu_custom_call.1} parent=0 // pred_fallthru
    _
  // Predicated region
  $region10: #{tpu_custom_call.1} parent=0 // pred_check
    _
  $region11: #{tpu_custom_call.1} parent=0 // pred_check_branch
    %13 = sbr.rel (0) target = $region13
  $region12: #{tpu_custom_call.1} parent=0 // pred_region
    %s14 = sadd.s32 0, 0
    %p15 = scmp.lt.s32.totalorder %s14, 0
    %s16 = scalar_select %p15, %s14, 0
    %s17 = smul.addr %s16, 8
    %s18 = scalar_lea.vmem %s2, %s17
    %s19 = sadd.s32 0, 0
  $region13: #{tpu_custom_call.1} parent=0 // pred_fallthru
    _
  %s20 = sadd.s32 0, 0
  %p21 = scmp.lt.s32.totalorder %s20, 0
  %s22 = scalar_select %p21, %s20, 0
  %s23 = smul.addr %s22, 8
  %s24 = scalar_lea.vmem %s2, %s23
  %s25 = sadd.s32 0, 0
  %p26 = scmp.lt.s32.totalorder %s25, 0
  %s27 = scalar_select %p26, %s25, 0
  %s28 = smul.addr %s27, 8
  %s29 = scalar_lea.vmem %s3, %s28
  %s30 = sadd.s32 0, 0
  %p31 = scmp.lt.s32.totalorder %s30, 0
  %s32 = scalar_select %p31, %s30, 0
  %s33 = smul.addr %s32, 8
  %s34 = scalar_lea.vmem %s2, %s33
  %s35 = sadd.s32 0, 0
  %s36 = sadd.s32 0, 0
  %p37 = scmp.lt.s32.totalorder %s36, 0
  %s38 = scalar_select %p37, %s36, 0
  %s39 = smul.addr %s38, 8
  %s40 = scalar_lea.vmem %s3, %s39
  %s41 = sadd.s32 0, 0
  %s43 = sadd.s32 0, 0
  %p44 = scmp.eq.s32.totalorder 0, 0
  // Predicated region
  $region14: #{tpu_custom_call.1} parent=0 // pred_check
    %p45 = pneg %p44
  $region15: #{tpu_custom_call.1} parent=0 // pred_check_branch
    %47 = sbr.rel (%p45) target = $region17
  $region16: #{tpu_custom_call.1} parent=0 // pred_region
    %s48 = smul.u32 %s43, 8
    %s49 = scalar_lea.vmem [#allocation2], %s48
    %vm50 = vcmask 7168
    %51 = vst.msk [vmem:[%s49] sm:$0xff] %vm50, -inf
    %s52 = scalar_lea.vmem [#allocation3], %s48
    %53 = vst.msk [vmem:[%s52] sm:$0xff] %vm50, 0.0
    %s54 = scalar_lea.vmem [#allocation4], %s48
    %55 = vst.msk [vmem:[%s54] sm:$0xff] %vm50, 0.0
  $region17: #{tpu_custom_call.1} parent=0 // pred_fallthru
    _
  %s56 = smul.u32 %s43, 8
  %s57 = sshra.s32 %s56, 3
  %s58 = sand.u32 %s56, 7
  %s59 = smul.addr %s57, 4
  %s60 = scalar_lea.vmem %s0, %s59
  %v61 = vld [vmem:[%s60] sm:$0xf]
  %v62 = vld [vmem:[%s1] sm:$0xf]
  %v63 = vld [vmem:[%s1 + $0x4] sm:$0xf]
  %v64 = vld [vmem:[%s1 + $0x8] sm:$0xf]
  %v65 = vld [vmem:[%s1 + $0xc] sm:$0xf]
  %v66 = vld [vmem:[%s1 + $0x10] sm:$0xf]
  %v67 = vld [vmem:[%s1 + $0x14] sm:$0xf]
  %v68 = vld [vmem:[%s1 + $0x18] sm:$0xf]
  %v69 = vld [vmem:[%s1 + $0x1c] sm:$0xf]
  %v70 = vld [vmem:[%s1 + $0x20] sm:$0xf]
  %v71 = vld [vmem:[%s1 + $0x24] sm:$0xf]
  %v72 = vld [vmem:[%s1 + $0x28] sm:$0xf]
  %v73 = vld [vmem:[%s1 + $0x2c] sm:$0xf]
  %v74 = vld [vmem:[%s1 + $0x30] sm:$0xf]
  %v75 = vld [vmem:[%s1 + $0x34] sm:$0xf]
  %v76 = vld [vmem:[%s1 + $0x38] sm:$0xf]
  %v77 = vld [vmem:[%s1 + $0x3c] sm:$0xf]
  %v78 = vld [vmem:[%s1 + $0x40] sm:$0xf]
  %v79 = vld [vmem:[%s1 + $0x44] sm:$0xf]
  %v80 = vld [vmem:[%s1 + $0x48] sm:$0xf]
  %v81 = vld [vmem:[%s1 + $0x4c] sm:$0xf]
  %v82 = vld [vmem:[%s1 + $0x50] sm:$0xf]
  %v83 = vld [vmem:[%s1 + $0x54] sm:$0xf]
  %v84 = vld [vmem:[%s1 + $0x58] sm:$0xf]
  %v85 = vld [vmem:[%s1 + $0x5c] sm:$0xf]
  %v86 = vld [vmem:[%s1 + $0x60] sm:$0xf]
  %v87 = vld [vmem:[%s1 + $0x64] sm:$0xf]
  %v88 = vld [vmem:[%s1 + $0x68] sm:$0xf]
  %v89 = vld [vmem:[%s1 + $0x6c] sm:$0xf]
  %v90 = vld [vmem:[%s1 + $0x70] sm:$0xf]
  %v91 = vld [vmem:[%s1 + $0x74] sm:$0xf]
  %v92 = vld [vmem:[%s1 + $0x78] sm:$0xf]
  %v93 = vld [vmem:[%s1 + $0x7c] sm:$0xf]
  %v126 = vunpack.c.l.b16 %v62
  %v127 = vunpack.c.l.b16 %v63
  %v128 = vunpack.c.l.b16 %v64
  %v129 = vunpack.c.l.b16 %v65
  %v130 = vunpack.c.l.b16 %v66
  %v131 = vunpack.c.l.b16 %v67
  %v132 = vunpack.c.l.b16 %v68
  %v133 = vunpack.c.l.b16 %v69
  %v134 = vunpack.c.l.b16 %v70
  %v135 = vunpack.c.l.b16 %v71
  %v136 = vunpack.c.l.b16 %v72
  %v137 = vunpack.c.l.b16 %v73
  %v138 = vunpack.c.l.b16 %v74
  %v139 = vunpack.c.l.b16 %v75
  %v140 = vunpack.c.l.b16 %v76
  %v141 = vunpack.c.l.b16 %v77
  %v142 = vunpack.c.l.b16 %v78
  %v143 = vunpack.c.l.b16 %v79
  %v144 = vunpack.c.l.b16 %v80
  %v145 = vunpack.c.l.b16 %v81
  %v146 = vunpack.c.l.b16 %v82
  %v147 = vunpack.c.l.b16 %v83
  %v148 = vunpack.c.l.b16 %v84
  %v149 = vunpack.c.l.b16 %v85
  %v150 = vunpack.c.l.b16 %v86
  %v151 = vunpack.c.l.b16 %v87
  %v152 = vunpack.c.l.b16 %v88
  %v153 = vunpack.c.l.b16 %v89
  %v154 = vunpack.c.l.b16 %v90
  %v155 = vunpack.c.l.b16 %v91
  %v156 = vunpack.c.l.b16 %v92
  %v157 = vunpack.c.l.b16 %v93
  %v158 = vpack.c.b16 %v127, %v126
  %v159 = vpack.c.b16 %v129, %v128
  %v160 = vpack.c.b16 %v131, %v130
  %v161 = vpack.c.b16 %v133, %v132
  %v162 = vpack.c.b16 %v135, %v134
  %v163 = vpack.c.b16 %v137, %v136
  %v164 = vpack.c.b16 %v139, %v138
  %v165 = vpack.c.b16 %v141, %v140
  %v166 = vpack.c.b16 %v143, %v142
  %v167 = vpack.c.b16 %v145, %v144
  %v168 = vpack.c.b16 %v147, %v146
  %v169 = vpack.c.b16 %v149, %v148
  %v170 = vpack.c.b16 %v151, %v150
  %v171 = vpack.c.b16 %v153, %v152
  %v172 = vpack.c.b16 %v155, %v154
  %v173 = vpack.c.b16 %v157, %v156
  %vm174 = vcmask 261120
  %v176 = vsel %vm174, %v61, 0
  %v179 = vsel %vm174, %v158, 0
  %v182 = vsel %vm174, %v159, 0
  %v185 = vsel %vm174, %v160, 0
  %v188 = vsel %vm174, %v161, 0
  %v191 = vsel %vm174, %v162, 0
  %v194 = vsel %vm174, %v163, 0
  %v197 = vsel %vm174, %v164, 0
  %v200 = vsel %vm174, %v165, 0
  %v203 = vsel %vm174, %v166, 0
  %v206 = vsel %vm174, %v167, 0
  %v209 = vsel %vm174, %v168, 0
  %v212 = vsel %vm174, %v169, 0
  %v215 = vsel %vm174, %v170, 0
  %v218 = vsel %vm174, %v171, 0
  %v221 = vsel %vm174, %v172, 0
  %v224 = vsel %vm174, %v173, 0
  %226 = vmatprep.subr.bf16.mxu0 0
  %227 = vmatpush1.bf16.xpose.msra.mxu0 %v200
  %228 = vmatprep.subr.bf16.mxu0 0
  %229 = vmatpush1.bf16.xpose.msra.mxu0 %v197
  %230 = vmatprep.subr.bf16.mxu0 0
  %231 = vmatpush1.bf16.xpose.msra.mxu0 %v194
  %232 = vmatprep.subr.bf16.mxu0 0
  %233 = vmatpush1.bf16.xpose.msra.mxu0 %v191
  %234 = vmatprep.subr.bf16.mxu0 0
  %235 = vmatpush1.bf16.xpose.msra.mxu0 %v188
  %236 = vmatprep.subr.bf16.mxu0 0
  %237 = vmatpush1.bf16.xpose.msra.mxu0 %v185
  %238 = vmatprep.subr.bf16.mxu0 0
  %239 = vmatpush1.bf16.xpose.msra.mxu0 %v182
  %240 = vmatprep.subr.bf16.mxu0 0
  %241 = vmatpush1.bf16.xpose.msra.mxu0 %v179
  %242 = vmatprep.subr.bf16.mxu0 0
  %243 = vmatpush2.bf16.xpose.msra.mxu0 %v224
  %244 = vmatprep.subr.bf16.mxu0 0
  %245 = vmatpush2.bf16.xpose.msra.mxu0 %v221
  %246 = vmatprep.subr.bf16.mxu0 0
  %247 = vmatpush2.bf16.xpose.msra.mxu0 %v218
  %248 = vmatprep.subr.bf16.mxu0 0
  %249 = vmatpush2.bf16.xpose.msra.mxu0 %v215
  %250 = vmatprep.subr.bf16.mxu0 0
  %251 = vmatpush2.bf16.xpose.msra.mxu0 %v212
  %252 = vmatprep.subr.bf16.mxu0 0
  %253 = vmatpush2.bf16.xpose.msra.mxu0 %v209
  %254 = vmatprep.subr.bf16.mxu0 0
  %255 = vmatpush2.bf16.xpose.msra.mxu0 %v206
  %256 = vmatprep.subr.bf16.mxu0 0
  %257 = vmatpush2.bf16.xpose.msra.mxu0 %v203
  %258 = vmatprep.mubr.bf16.mxu0 0
  %259 = vmatmul.mubr.bf16.gmra.mxu0 %v176
  %v260 = vpop.f32.mrf.mxu0
  %v261 = vadd.f32 0.0, %v260
  %v262 = vpop.f32.mrf.mxu0
  %v263 = vadd.f32 0.0, %v262
  %v264 = vpop.f32.mrf.mxu0
  %v265 = vpop.f32.mrf.mxu0
  %266 = vdwg.mxu0
  %v267 = vld [vmem:[%s34] sm:$0xff]
  %s268 = smul.u32 0, 256
  %v269 = vstv %s268
  %v270 = vsub.s32 %v267, %v269
  %v271 = vlaneseq
  %v272 = vand.u32 %v271, 127
  %v273 = vadd.s32 %v272, 128
  %274 = vset.pattern.permute.xlu0 0
  %275 = vperm.xlu0 %274, %v270
  %v276 = vpop.permute.xlu0 %275
  %vm277 = vcmp.eq.s32.totalorder %v272, %v276
  %vm278 = vcmp.eq.s32.totalorder %v273, %v276
  %s279 = scalar_lea.vmem [#allocation4], %s56
  %v280 = vld [vmem:[%s279] sm:$0xff]
  %v281 = vsel %vm277, %v261, 0.0
  %v282 = vsel %vm278, %v263, 0.0
  %v283 = vadd.f32 %v281, %v282
  %284 = vadd.xlane.f32.xlu0 %v283
  %v285 = vpop.xlane.xlu0 %284
  %v286 = vadd.f32 %v280, %v285
  %vm287 = vcmask 7168
  %288 = vst.msk [vmem:[%s279] sm:$0xff] %vm287, %v286
  %v289 = vmax.f32 %v261, %v263
  %290 = vmax.xlane.f32.xlu0 %v289
  %v291 = vpop.xlane.xlu0 %290
  %s292 = scalar_lea.vmem [#allocation2], %s56
  %v293 = vld [vmem:[%s292] sm:$0xff]
  %v294 = vmax.f32 %v293, %v291
  %s295 = scalar_lea.vmem [#allocation3], %s56
  %v296 = vld [vmem:[%s295] sm:$0xff]
  %v297 = vsub.f32 %v293, %v294
  %v298 = vmul.f32 %v297, 1.442695
  %v299 = vpow.pop %v298
  %v300 = vmul.f32 %v296, %v299
  %302 = vset.pattern.permute.xlu0 0
  %303 = vperm.xlu0 %302, %v294
  %v304 = vpop.permute.xlu0 %303
  %v306 = vsub.f32 %v261, %v304
  %v307 = vsub.f32 %v263, %v304
  %v308 = vmul.f32 %v306, 1.442695
  %v309 = vpow.pop %v308
  %v310 = vmul.f32 %v307, 1.442695
  %v311 = vpow.pop %v310
  %v312 = vadd.f32 %v309, %v311
  %313 = vadd.xlane.f32.xlu0 %v312
  %v314 = vpop.xlane.xlu0 %313
  %v315 = vadd.f32 %v300, %v314
  %316 = vst.msk [vmem:[%s292] sm:$0xff] %vm287, %v294
  %317 = vst.msk [vmem:[%s295] sm:$0xff] %vm287, %v315
  // Predicated region
  $region18: #{tpu_custom_call.1} parent=0 // pred_check
    %p318 = pneg %p44
  $region19: #{tpu_custom_call.1} parent=0 // pred_check_branch
    %320 = sbr.rel (%p318) target = $region21
  $region20: #{tpu_custom_call.1} parent=0 // pred_region
    %v321 = vld [vmem:[%s279] sm:$0xff]
    %v322 = vsub.f32 %v321, %v294
    %v323 = vlog2.pop %v315
    %v324 = vmul.f32 %v323, 0.6931472
    %v325 = vsub.f32 %v322, %v324
    %v326 = vsub.f32 0.0, %v325
    %vm327 = vcmp.ne.s32.totalorder %v267, 4294967196
    %v328 = vsel %vm327, %v326, 0.0
    %329 = vst.msk [vmem:[%s40] sm:$0xff] %vm287, %v328
  $region21: #{tpu_custom_call.1} parent=0 // pred_fallthru
    _
  %s330 = sadd.s32 0, 0
  %p331 = scmp.lt.s32.totalorder %s330, 0
  %s332 = scalar_select %p331, %s330, 0
  %s333 = smul.addr %s332, 8
  %s334 = scalar_lea.vmem %s3, %s333
  // Predicated region
  $region22: #{tpu_custom_call.1} parent=0 // pred_check
    _
  $region23: #{tpu_custom_call.1} parent=0 // pred_check_branch
    %336 = sbr.rel (0) target = $region25
  $region24: #{tpu_custom_call.1} parent=0 // pred_region
    %s337 = sadd.s32 0, 0
  $region25: #{tpu_custom_call.1} parent=0 // pred_fallthru
    _
  // Predicated region
  $region26: #{tpu_custom_call.1} parent=0 // pred_check
    _
  $region27: #{tpu_custom_call.1} parent=0 // pred_check_branch
    %339 = sbr.rel (0) target = $region29
  $region28: #{tpu_custom_call.1} parent=0 // pred_region
    %s340 = sadd.s32 0, 0
    %p341 = scmp.lt.s32.totalorder %s340, 0
    %s342 = scalar_select %p341, %s340, 0
    %s343 = smul.addr %s342, 8
    %s344 = scalar_lea.vmem %s3, %s343
  $region29: #{tpu_custom_call.1} parent=0 // pred_fallthru
    _

</llo_original>
